<compile_context>
chip_gen: v5e
topology: v5e:2x2
jax: 0.10.0
libtpu: 0.0.40
codegen_flags: <defaults>
</compile_context>

<pallas_src>
import functools

import jax
import jax.numpy as jnp
from jax.experimental import pallas as pl
from jax.experimental.pallas import tpu as pltpu


def _round_up(x, m):
    return ((x + m - 1) // m) * m


def _group_linear_kernel(gid_ref, x_ref, w_ref, o_ref, acc_ref, *, resident):
    """Grid = (token_tiles, n_groups); group axis is a masked reduction."""
    g = pl.program_id(1)

    @pl.when(g == 0)
    def _():
        acc_ref[...] = jnp.zeros_like(acc_ref)

    # Weight is pre-transposed to (I, Opad): contraction dim leading, no `.T`.
    w = w_ref[g] if resident else w_ref[0]                    # (I, Opad)
    partial = jnp.dot(x_ref[...], w,
                      preferred_element_type=jnp.float32)     # (tm, Opad), MXU
    mask = gid_ref[...] == g                                  # (tm, 1)
    acc_ref[...] += jnp.where(mask, partial, 0.0)

    @pl.when(g == pl.num_programs(1) - 1)
    def _():
        o_ref[...] = acc_ref[...].astype(o_ref.dtype)


def group_linear(x, group, weight, *, tm=256, compute_dtype=jnp.float32,
                 weight_resident_budget_bytes=8 * 1024 * 1024):
    """x: (N, S, I), group: (N, S) int, weight: (G, O, I) -> (N, S, O) f32."""
    N, S, I = x.shape
    G, O, _ = weight.shape
    M = N * S

    Op = _round_up(O, 128)                         # lane-dense output features
    tm_eff = max(8, min(_round_up(tm, 8), _round_up(M, 8)))
    Mp = _round_up(M, tm_eff)

    # Flatten the token axis; pad tokens (group id -1 never matches any group).
    x_flat = x.reshape(M, I).astype(compute_dtype)
    x_pad = jnp.pad(x_flat, ((0, Mp - M), (0, 0)))
    gid = jnp.pad(group.reshape(M).astype(jnp.int32), (0, Mp - M),
                  constant_values=-1).reshape(Mp, 1)

    # Pre-transpose weight once: (G, O, I) -> (G, I, Opad).
    w_t = jnp.swapaxes(weight, 1, 2).astype(compute_dtype)
    w_t = jnp.pad(w_t, ((0, 0), (0, 0), (0, Op - O)))

    itemsize = jnp.dtype(compute_dtype).itemsize
    w_bytes = G * I * Op * itemsize
    resident = w_bytes <= weight_resident_budget_bytes

    if resident:
        # Whole weight tensor resident in VMEM; constant index_map -> one DMA.
        w_spec = pl.BlockSpec((G, I, Op), lambda i, g: (0, 0, 0))
    else:
        w_spec = pl.BlockSpec((1, I, Op), lambda i, g: (g, 0, 0))

    # Rough double-buffered footprint + accumulator scratch, with slack.
    tile_bytes = (tm_eff * 128 * 4                              # gid tile
                  + tm_eff * I * itemsize                       # x tile
                  + (G if resident else 1) * I * Op * itemsize  # weight
                  + tm_eff * Op * 4)                            # out tile
    vmem_limit = int(min(max(4 * tile_bytes + tm_eff * Op * 4, 32 * 2**20),
                         64 * 2**20))

    out_pad = pl.pallas_call(
        functools.partial(_group_linear_kernel, resident=resident),
        out_shape=jax.ShapeDtypeStruct((Mp, Op), jnp.float32),
        grid_spec=pltpu.PrefetchScalarGridSpec(
            num_scalar_prefetch=0,
            grid=(Mp // tm_eff, G),
            in_specs=[
                pl.BlockSpec((tm_eff, 1), lambda i, g: (i, 0)),    # group ids
                pl.BlockSpec((tm_eff, I), lambda i, g: (i, 0)),    # x tile
                w_spec,                                            # weight
            ],
            out_specs=pl.BlockSpec((tm_eff, Op), lambda i, g: (i, 0)),
            scratch_shapes=[pltpu.VMEM((tm_eff, Op), jnp.float32)],
        ),
        compiler_params=pltpu.CompilerParams(
            dimension_semantics=("parallel", "arbitrary"),
            vmem_limit_bytes=vmem_limit),
    )(gid, x_pad, w_t)

    return out_pad[:M, :O].reshape(N, S, O)


def init_group_linear_weight(key, n_groups, out_features, in_features):
    # xavier_uniform_ per group: U(-b, b), b = sqrt(6 / (fan_in + fan_out))
    bound = (6.0 / (in_features + out_features)) ** 0.5
    return jax.random.uniform(
        key, (n_groups, out_features, in_features),
        minval=-bound, maxval=bound, dtype=jnp.float32)


if __name__ == "__main__":
    key = jax.random.PRNGKey(0)
    k_w, k_x, k_g = jax.random.split(key, 3)

    N, S, I, O, G = 2, 8, 32, 48, 4

    weight = init_group_linear_weight(k_w, G, O, I)
    x = jax.random.normal(k_x, (N, S, I), dtype=jnp.float32)
    group = jax.random.randint(k_g, (N, S), 0, G, dtype=jnp.int32)

    out = jax.block_until_ready(group_linear(x, group, weight))

    # Pure-JAX reference matching the PyTorch forward exactly.
    ref_full = jnp.einsum("nsi,goi->nsgo", x, weight)                  # (N, S, G, O)
    ref = jnp.take_along_axis(ref_full, group[:, :, None, None], axis=2)[:, :, 0, :]

    assert out.shape == (N, S, O)
    assert jnp.allclose(out, ref, atol=1e-5, rtol=1e-5), "f32 mismatch vs reference"

    # bf16 compute path (f32 accumulation) — looser tolerance.
    out_bf16 = jax.block_until_ready(
        group_linear(x, group, weight, compute_dtype=jnp.bfloat16))
    assert out_bf16.shape == (N, S, O)
    assert jnp.allclose(out_bf16, ref, atol=1e-1, rtol=1e-1), "bf16 mismatch vs reference"

    print("KERNEL_OK")
</pallas_src>

<mosaic_0001>
module attributes {stable_mosaic.version = 11 : i64} {
  func.func @_group_linear_kernel(%arg0: i32, %arg1: i32, %arg2: memref<16x1xi32, #tpu.memory_space<vmem>>, %arg3: memref<16x32xf32, #tpu.memory_space<vmem>>, %arg4: memref<4x32x128xf32, #tpu.memory_space<vmem>>, %arg5: memref<16x128xf32, #tpu.memory_space<vmem>>, %arg6: memref<16x128xf32, #tpu.memory_space<vmem>>) attributes {dimension_semantics = [#tpu.dimension_semantics<parallel>, #tpu.dimension_semantics<arbitrary>], iteration_bounds = array<i64: 1, 4>, scalar_prefetch = 0 : i64, scratch_operands = 1 : i64, tpu.core_type = #tpu.core_type<tc>, window_params = [{transform_indices = @transform_0, window_bounds = array<i64: 16, 1>}, {transform_indices = @transform_1, window_bounds = array<i64: 16, 32>}, {pipeline_mode = #tpu.pipeline_mode<synchronous>, transform_indices = @transform_2, window_bounds = array<i64: 4, 32, 128>}, {transform_indices = @transform_3, window_bounds = array<i64: 16, 128>}]} {
    %c0_i32 = arith.constant 0 : i32
    %0 = arith.cmpi eq, %arg1, %c0_i32 : i32
    %1 = arith.extui %0 : i1 to i32
    %c0_i32_0 = arith.constant 0 : i32
    %2 = arith.cmpi ne, %1, %c0_i32_0 : i32
    scf.if %2 {
      %cst_12 = arith.constant 0.000000e+00 : f32
      %21 = vector.broadcast %cst_12 : f32 to vector<16x128xf32>
      %c0_13 = arith.constant 0 : index
      %c0_14 = arith.constant 0 : index
      %22 = vector.load %arg6[%c0_13, %c0_14] : memref<16x128xf32, #tpu.memory_space<vmem>>, vector<16x128xf32>
      tpu.vector_store %arg6[%c0_13, %c0_14], %21 {strides = array<i32>} : memref<16x128xf32, #tpu.memory_space<vmem>>, vector<16x128xf32>,
    } else {
    }
    %3 = arith.index_cast %arg1 : i32 to index
    %c0 = arith.constant 0 : index
    %c0_1 = arith.constant 0 : index
    %4 = vector.load %arg4[%3, %c0, %c0_1] : memref<4x32x128xf32, #tpu.memory_space<vmem>>, vector<1x32x128xf32>
    %5 = vector.shape_cast %4 : vector<1x32x128xf32> to vector<32x128xf32>
    %c0_2 = arith.constant 0 : index
    %c0_3 = arith.constant 0 : index
    %6 = vector.load %arg3[%c0_2, %c0_3] : memref<16x32xf32, #tpu.memory_space<vmem>>, vector<16x32xf32>
    %cst = arith.constant dense<0.000000e+00> : vector<16x128xf32>
    %7 = tpu.matmul %6, %5, %cst {dimension_numbers = #tpu.dot_dimension_numbers<[1], [0], [0], [1], [0, 0, 1, 1], [], []>} : vector<16x32xf32>, vector<32x128xf32>, vector<16x128xf32> -> vector<16x128xf32>
    %c0_4 = arith.constant 0 : index
    %c0_5 = arith.constant 0 : index
    %8 = vector.load %arg2[%c0_4, %c0_5] : memref<16x1xi32, #tpu.memory_space<vmem>>, vector<16x1xi32>
    %9 = vector.broadcast %arg1 : i32 to vector<16x1xi32>
    %10 = arith.cmpi eq, %8, %9 : vector<16x1xi32>
    %c0_6 = arith.constant 0 : index
    %c0_7 = arith.constant 0 : index
    %11 = vector.load %arg6[%c0_6, %c0_7] : memref<16x128xf32, #tpu.memory_space<vmem>>, vector<16x128xf32>
    %cst_8 = arith.constant 0.000000e+00 : f32
    %12 = vector.shape_cast %10 : vector<16x1xi1> to vector<16x1xi1>
    %13 = vector.broadcast %12 : vector<16x1xi1> to vector<16x128xi1>
    %14 = vector.broadcast %cst_8 : f32 to vector<16x128xf32>
    %15 = arith.select %13, %7, %14 : vector<16x128xi1>, vector<16x128xf32>
    %16 = arith.addf %11, %15 : vector<16x128xf32>
    %c0_9 = arith.constant 0 : index
    %c0_10 = arith.constant 0 : index
    %17 = vector.load %arg6[%c0_9, %c0_10] : memref<16x128xf32, #tpu.memory_space<vmem>>, vector<16x128xf32>
    tpu.vector_store %arg6[%c0_9, %c0_10], %16 {strides = array<i32>} : memref<16x128xf32, #tpu.memory_space<vmem>>, vector<16x128xf32>,
    %c3_i32 = arith.constant 3 : i32
    %18 = arith.cmpi eq, %arg1, %c3_i32 : i32
    %19 = arith.extui %18 : i1 to i32
    %c0_i32_11 = arith.constant 0 : i32
    %20 = arith.cmpi ne, %19, %c0_i32_11 : i32
    scf.if %20 {
      %c0_12 = arith.constant 0 : index
      %c0_13 = arith.constant 0 : index
      %21 = vector.load %arg6[%c0_12, %c0_13] : memref<16x128xf32, #tpu.memory_space<vmem>>, vector<16x128xf32>
      %c0_14 = arith.constant 0 : index
      %c0_15 = arith.constant 0 : index
      %22 = vector.load %arg5[%c0_14, %c0_15] : memref<16x128xf32, #tpu.memory_space<vmem>>, vector<16x128xf32>
      tpu.vector_store %arg5[%c0_14, %c0_15], %21 {strides = array<i32>} : memref<16x128xf32, #tpu.memory_space<vmem>>, vector<16x128xf32>,
    } else {
    }
    return
  }
  func.func @transform_0(%arg0: i32, %arg1: i32) -> (i32, i32) {
    %c0_i32 = arith.constant 0 : i32
    %c0_i32_0 = arith.constant 0 : i32
    return %arg0, %c0_i32 : i32, i32
  }
  func.func @transform_1(%arg0: i32, %arg1: i32) -> (i32, i32) {
    %c0_i32 = arith.constant 0 : i32
    %c0_i32_0 = arith.constant 0 : i32
    return %arg0, %c0_i32 : i32, i32
  }
  func.func @transform_2(%arg0: i32, %arg1: i32) -> (i32, i32, i32) {
    %c0_i32 = arith.constant 0 : i32
    %c0_i32_0 = arith.constant 0 : i32
    %c0_i32_1 = arith.constant 0 : i32
    %c0_i32_2 = arith.constant 0 : i32
    return %c0_i32, %c0_i32_0, %c0_i32_1 : i32, i32, i32
  }
  func.func @transform_3(%arg0: i32, %arg1: i32) -> (i32, i32) {
    %c0_i32 = arith.constant 0 : i32
    %c0_i32_0 = arith.constant 0 : i32
    return %arg0, %c0_i32 : i32, i32
  }
}

</mosaic_0001>

<llo_original>
// kernel: tpu_custom_call.1
$region0: #{tpu_custom_call.1}
  #allocation0 [shape = 'u32[]', space=smem, size = 0x4, offset = 0x4, fixed_abs, tag = 'smem constant byte address 0x4 - core index']
  #allocation1 [shape = 'u32[72,128]{1,0:T(1,128)}', space=vmem, size = 0x9000, scoped, tag = 'internal scratch']
  #allocation2 [shape = 'f32[16,128]{1,0:T(8,128)}', space=vmem, size = 0x2000, scoped, tag = 'scratch operand']
  %s0 = inlined_call_operand.vmem [shape: s32[16,1], index: 0, kind: input, shape index: {}]
  %s1 = inlined_call_operand.vmem [shape: f32[16,32], index: 1, kind: input, shape index: {}]
  %s2 = inlined_call_operand.hbm [shape: f32[4,32,128], index: 2, kind: input, shape index: {}]
  %s3 = inlined_call_operand.hbm [shape: f32[16,128], index: 3, kind: output, shape index: {}]
  %s4 = sld [smem:[#allocation0]]
  $region57: #{tpu_custom_call.1} parent=0
    _
  %s6 = ssub.s32 1, %s4
  %s7 = scalar_select 0, %s6, %s4
  $region1: #{tpu_custom_call.1} parent=0
    #allocation3 [shape = 'u8[65536]{0}', space=vmem, size = 0x10000, scoped, tag = 'input window, operand 2, single buffered']
    #allocation4 [shape = 's32[2]{0}', space=sflag, size = 0x8, scoped, tag = 'scoped memory for tpu_custom_call.1']
    #allocation5 [shape = 's32[2]{0}', space=sflag, size = 0x8, scoped, tag = 'scoped memory for tpu_custom_call.1']
    #allocation6 [shape = 'u8[8192]{0}', space=vmem, size = 0x2000, scoped, tag = 'output window, operand 0, single buffered']
    %8 = vsyncpa [#allocation4], 0
    %9 = vsyncpa [#allocation5], 0
    loop: start=0, step=1, limit=6
    $region2: #{tpu_custom_call.1} parent=1 // loop_pre_header
      _
    $region3: #{tpu_custom_call.1} parent=1 // loop_header
      %s11 = sphi 0, %s15
      %p12 = scmp.ge.s32.totalorder %s11, 6
      %s18 = sphi 0, %s30
      %s19 = sphi 0, %s26
      %s20 = sphi 0, %s18
      %s21 = sphi 0, %s19
      %s22 = sphi 0, %s20
      %s23 = sphi 0, %s21
      %s33 = sphi 0, %s35
      %s36 = sphi 0, %s33
      %s37 = sphi 0, %s36
      %s53 = sphi 0, %s37
      %s59 = sphi 0, %s61
      %s62 = sphi 0, %s59
      %s63 = sphi 0, %s62
      %s79 = sphi 0, %s63
      %s83 = sphi 0, %s83
      %s85 = sphi 0, %s83
      %s86 = sphi 0, %s85
      %s100 = sphi 0, %s86
      %s106 = sphi 0, %s108
      %s109 = sphi 0, %s106
      %s110 = sphi 0, %s109
      %s126 = sphi 0, %s110
    $region4: #{tpu_custom_call.1} parent=1 // loop_header_branch
      %14 = sbr.rel (%p12) target = $region8
    $region5: #{tpu_custom_call.1} parent=1 // loop_body
      %s16 = ssub.s32 %s11, 1
      %s17 = ssub.s32 %s11, 2
      %s24 = sadd.s32 1, %s19
      %p25 = scmp.ge.s32.totalorder %s24, 4
      %s26 = scalar_select %p25, 0, %s24
      %s27 = sadd.s32 1, %s18
      %s28 = scalar_select %p25, %s27, %s18
      %p29 = scmp.ge.s32.totalorder %s28, 1
      %s30 = scalar_select %p29, 0, %s28
      %s31 = ssub.s32 %s18, %s30
      %p32 = scmp.eq.s32.totalorder %s31, 0
      %s34 = sadd.s32 %s33, 1
      %s35 = scalar_select %p32, %s33, %s34
      %p38 = pneg %p32
      %p39 = scmp.eq.s32.totalorder %s11, 3
      %p40 = por %p38, %p39
      %p41 = scmp.ne.s32.totalorder %s33, %s36
      %p42 = scmp.eq.s32.totalorder %s11, 0
      %p43 = por %p41, %p42
      %p44 = scmp.ne.s32.totalorder %s33, %s36
      %p45 = scmp.eq.s32.totalorder %s16, 3
      %p46 = por %p44, %p45
      %p47 = scmp.ne.s32.totalorder %s36, %s37
      %p48 = scmp.eq.s32.totalorder %s16, 0
      %p49 = por %p47, %p48
      %p50 = scmp.ne.s32.totalorder %s36, %s37
      %p51 = scmp.eq.s32.totalorder %s17, 3
      %p52 = por %p50, %p51
      %p54 = scmp.ne.s32.totalorder %s37, %s53
      %p55 = scmp.eq.s32.totalorder %s17, 0
      %p56 = por %p54, %p55
      %s57 = ssub.s32 %s18, %s30
      %p58 = scmp.eq.s32.totalorder %s57, 0
      %s60 = sadd.s32 %s59, 1
      %s61 = scalar_select %p58, %s59, %s60
      %p64 = pneg %p58
      %p65 = scmp.eq.s32.totalorder %s11, 3
      %p66 = por %p64, %p65
      %p67 = scmp.ne.s32.totalorder %s59, %s62
      %p68 = scmp.eq.s32.totalorder %s11, 0
      %p69 = por %p67, %p68
      %p70 = scmp.ne.s32.totalorder %s59, %s62
      %p71 = scmp.eq.s32.totalorder %s16, 3
      %p72 = por %p70, %p71
      %p73 = scmp.ne.s32.totalorder %s62, %s63
      %p74 = scmp.eq.s32.totalorder %s16, 0
      %p75 = por %p73, %p74
      %p76 = scmp.ne.s32.totalorder %s62, %s63
      %p77 = scmp.eq.s32.totalorder %s17, 3
      %p78 = por %p76, %p77
      %p80 = scmp.ne.s32.totalorder %s63, %s79
      %p81 = scmp.eq.s32.totalorder %s17, 0
      %p82 = por %p80, %p81
      %s84 = sadd.s32 %s83, 1
      %p87 = scmp.eq.s32.totalorder %s11, 3
      %p88 = scmp.ne.s32.totalorder %s83, %s85
      %p89 = scmp.eq.s32.totalorder %s11, 0
      %p90 = por %p88, %p89
      %p91 = scmp.ne.s32.totalorder %s83, %s85
      %p92 = scmp.eq.s32.totalorder %s16, 3
      %p93 = por %p91, %p92
      %p94 = scmp.ne.s32.totalorder %s85, %s86
      %p95 = scmp.eq.s32.totalorder %s16, 0
      %p96 = por %p94, %p95
      %p97 = scmp.ne.s32.totalorder %s85, %s86
      %p98 = scmp.eq.s32.totalorder %s17, 3
      %p99 = por %p97, %p98
      %p101 = scmp.ne.s32.totalorder %s86, %s100
      %p102 = scmp.eq.s32.totalorder %s17, 0
      %p103 = por %p101, %p102
      %s104 = ssub.s32 %s18, %s30
      %p105 = scmp.eq.s32.totalorder %s104, 0
      %s107 = sadd.s32 %s106, 1
      %s108 = scalar_select %p105, %s106, %s107
      %p111 = pneg %p105
      %p112 = scmp.eq.s32.totalorder %s11, 3
      %p113 = por %p111, %p112
      %p114 = scmp.ne.s32.totalorder %s106, %s109
      %p115 = scmp.eq.s32.totalorder %s11, 0
      %p116 = por %p114, %p115
      %p117 = scmp.ne.s32.totalorder %s106, %s109
      %p118 = scmp.eq.s32.totalorder %s16, 3
      %p119 = por %p117, %p118
      %p120 = scmp.ne.s32.totalorder %s109, %s110
      %p121 = scmp.eq.s32.totalorder %s16, 0
      %p122 = por %p120, %p121
      %p123 = scmp.ne.s32.totalorder %s109, %s110
      %p124 = scmp.eq.s32.totalorder %s17, 3
      %p125 = por %p123, %p124
      %p127 = scmp.ne.s32.totalorder %s110, %s126
      %p128 = scmp.eq.s32.totalorder %s17, 0
      %p129 = por %p127, %p128
      %p130 = scmp.le.s32.totalorder 1, %s11
      %p131 = scmp.lt.s32.totalorder %s11, 5
      %p132 = pnand %p130, %p131
      %p133 = pneg %p132
      // Predicated region
      $region9: #{tpu_custom_call.1} parent=5 // pred_check
        _
      $region10: #{tpu_custom_call.1} parent=5 // pred_check_branch
        %135 = sbr.rel (%p132) target = $region12
      $region11: #{tpu_custom_call.1} parent=5 // pred_region
        %s136 = ssub.s32 %s11, 1
        // Predicated region
        $region13: #{tpu_custom_call.1} parent=11 // pred_check
          %p137 = pneg %p49
        $region14: #{tpu_custom_call.1} parent=11 // pred_check_branch
          %139 = sbr.rel (%p137) target = $region16
        $region15: #{tpu_custom_call.1} parent=11 // pred_region
          %s140 = smul.u32 2, %s20
          %p141 = scmp.lt.s32.totalorder %s140, 1
          %s142 = scalar_select %p141, %s140, 1
          %s143 = smul.addr %s142, 8
          %s144 = scalar_lea.vmem %s0, %s143
          %s145 = smul.u32 2, %s20
        $region16: #{tpu_custom_call.1} parent=11 // pred_fallthru
          _
        // Predicated region
        $region17: #{tpu_custom_call.1} parent=11 // pred_check
          %p146 = pneg %p75
        $region18: #{tpu_custom_call.1} parent=11 // pred_check_branch
          %148 = sbr.rel (%p146) target = $region20
        $region19: #{tpu_custom_call.1} parent=11 // pred_region
          %s149 = smul.u32 2, %s20
          %p150 = scmp.lt.s32.totalorder %s149, 1
          %s151 = scalar_select %p150, %s149, 1
          %s152 = smul.addr %s151, 8
          %s153 = scalar_lea.vmem %s1, %s152
          %s154 = smul.u32 2, %s20
        $region20: #{tpu_custom_call.1} parent=11 // pred_fallthru
          _
        // Predicated region
        $region21: #{tpu_custom_call.1} parent=11 // pred_check
          %p155 = pneg %p96
        $region22: #{tpu_custom_call.1} parent=11 // pred_check_branch
          %157 = sbr.rel (%p155) target = $region24
        $region23: #{tpu_custom_call.1} parent=11 // pred_region
          %159 = vsyncadd [#allocation4], 0
          %s160 = sshll.u32 %s2, 4
          %s161 = int_to_ptr.hbm [resolvable:$true] %s160
          %s162 = sshll.u32 [#allocation3], 4
          %s163 = int_to_ptr.vmem [resolvable:$true] %s162
          %168 = dma.hbm_to_vmem [thread:$0]  %s161, 2048, %s163, [#allocation4], 128, 128, 8
        $region24: #{tpu_custom_call.1} parent=11 // pred_fallthru
          _
      $region12: #{tpu_custom_call.1} parent=5 // pred_fallthru
        _
      %p169 = scmp.lt.s32.totalorder %s11, 4
      // Predicated region
      $region25: #{tpu_custom_call.1} parent=5 // pred_check
        %p170 = pneg %p169
      $region26: #{tpu_custom_call.1} parent=5 // pred_check_branch
        %172 = sbr.rel (%p170) target = $region28
      $region27: #{tpu_custom_call.1} parent=5 // pred_region
        _
      $region28: #{tpu_custom_call.1} parent=5 // pred_fallthru
        _
      %p173 = scmp.le.s32.totalorder 1, %s11
      %p174 = scmp.lt.s32.totalorder %s11, 5
      %p175 = pnand %p173, %p174
      %p176 = pneg %p175
      // Predicated region
      $region29: #{tpu_custom_call.1} parent=5 // pred_check
        _
      $region30: #{tpu_custom_call.1} parent=5 // pred_check_branch
        %178 = sbr.rel (%p175) target = $region32
      $region31: #{tpu_custom_call.1} parent=5 // pred_region
        %s179 = ssub.s32 %s11, 1
        // Predicated region
        $region33: #{tpu_custom_call.1} parent=31 // pred_check
          %p180 = pneg %p96
        $region34: #{tpu_custom_call.1} parent=31 // pred_check_branch
          %182 = sbr.rel (%p180) target = $region36
        $region35: #{tpu_custom_call.1} parent=31 // pred_region
          %184 = dma.done [#allocation4], 2048
        $region36: #{tpu_custom_call.1} parent=31 // pred_fallthru
          _
        %s185 = smul.u32 2, %s20
        %p186 = scmp.lt.s32.totalorder %s185, 1
        %s187 = scalar_select %p186, %s185, 1
        %s188 = smul.addr %s187, 8
        %s189 = scalar_lea.vmem %s0, %s188
        %p190 = pneg %p49
        %p191 = pneg %p46
        %s192 = smul.u32 2, %s20
        %p193 = scmp.lt.s32.totalorder %s192, 1
        %s194 = scalar_select %p193, %s192, 1
        %s195 = smul.addr %s194, 8
        %s196 = scalar_lea.vmem %s1, %s195
        %p197 = pneg %p75
        %p198 = pneg %p72
        %p199 = pneg %p96
        %p200 = pneg %p93
        %p201 = pneg %p122
        %p202 = pneg %p119
        %s203 = smul.u32 2, %s20
        %p204 = scmp.lt.s32.totalorder %s203, 1
        %s205 = scalar_select %p204, %s203, 1
        %s206 = smul.addr %s205, 8
        %s207 = scalar_lea.vmem %s0, %s206
        %s208 = smul.u32 2, %s20
        %s209 = smul.u32 2, %s20
        %p210 = scmp.lt.s32.totalorder %s209, 1
        %s211 = scalar_select %p210, %s209, 1
        %s212 = smul.addr %s211, 8
        %s213 = scalar_lea.vmem %s1, %s212
        %s214 = smul.u32 2, %s20
        %s215 = smul.u32 2, %s20
        %p216 = scmp.eq.s32.totalorder %s21, 0
        // Predicated region
        $region37: #{tpu_custom_call.1} parent=31 // pred_check
          %p217 = pneg %p216
        $region38: #{tpu_custom_call.1} parent=31 // pred_check_branch
          %219 = sbr.rel (%p217) target = $region40
        $region39: #{tpu_custom_call.1} parent=31 // pred_region
          %220 = vst [vmem:[#allocation2] sm:$0xff] 0.0
          %221 = vst [vmem:[#allocation2 + $0x8] sm:$0xff] 0.0
        $region40: #{tpu_custom_call.1} parent=31 // pred_fallthru
          _
        %s222 = smul.u32 %s21, 32
        %s223 = scalar_lea.vmem [#allocation3], %s222
        %v224 = vld [vmem:[%s223] sm:$0xff]
        %v225 = vld [vmem:[%s223 + $0x8] sm:$0xff]
        %v226 = vld [vmem:[%s223 + $0x10] sm:$0xff]
        %v227 = vld [vmem:[%s223 + $0x18] sm:$0xff]
        %v228 = vld [vmem:[%s213] sm:$0xff]
        %v229 = vld [vmem:[%s213 + $0x8] sm:$0xff]
        %vm230 = vcmask 261120
        %v232 = vsel %vm230, %v228, 0
        %v235 = vsel %vm230, %v229, 0
        %237 = vmatpush.msra.mxu0 0.0
        %238 = vmatpush.msra.mxu0 0.0
        %239 = vmatpush.msra.mxu0 0.0
        %240 = vmatpush.msra.mxu0 0.0
        %241 = vmatpush.msra.mxu0 0.0
        %242 = vmatpush.msra.mxu0 0.0
        %243 = vmatpush.msra.mxu0 0.0
        %244 = vmatpush.msra.mxu0 0.0
        %245 = vmatpush.msra.mxu0 0.0
        %246 = vmatpush.msra.mxu0 0.0
        %247 = vmatpush.msra.mxu0 0.0
        %248 = vmatpush.msra.mxu0 0.0
        %249 = vmatpush.msra.mxu0 %v227
        %250 = vmatpush.msra.mxu0 %v226
        %251 = vmatpush.msra.mxu0 %v225
        %252 = vmatpush.msra.mxu0 %v224
        %253 = vmatmul.f32.gmra.mxu0 %v232
        %v254 = vpop.f32.mrf.mxu0
        %v255 = vadd.f32 0.0, %v254
        %256 = vmatmul.f32.gmra.mxu0 %v235
        %v257 = vpop.f32.mrf.mxu0
        %v258 = vadd.f32 0.0, %v257
        %259 = vdwg.mxu0
        %v260 = vld [vmem:[%s207] sm:$0xff]
        %v261 = vld [vmem:[%s207 + $0x8] sm:$0xff]
        %v262 = vstv %s21
        %vm263 = vcmp.eq.s32.totalorder %v260, %v262
        %vm264 = vcmp.eq.s32.totalorder %v261, %v262
        %v265 = vld [vmem:[#allocation2] sm:$0xff]
        %v266 = vld [vmem:[#allocation2 + $0x8] sm:$0xff]
        %v267 = vsel %vm263, 1, 0
        %v268 = vsel %vm264, 1, 0
        %269 = vset.pattern.permute.xlu0 0
        %270 = vperm.xlu0 %269, %v267
        %v271 = vpop.permute.xlu0 %270
        %272 = vset.pattern.permute.xlu0 0
        %273 = vperm.xlu0 %272, %v268
        %v274 = vpop.permute.xlu0 %273
        %vm275 = vcmp.eq.s32.totalorder %v271, 1
        %vm276 = vcmp.eq.s32.totalorder %v274, 1
        %v277 = vsel %vm275, %v255, 0.0
        %v278 = vsel %vm276, %v258, 0.0
        %v279 = vadd.f32 %v265, %v277
        %v280 = vadd.f32 %v266, %v278
        %281 = vst [vmem:[#allocation2] sm:$0xff] %v279
        %282 = vst [vmem:[#allocation2 + $0x8] sm:$0xff] %v280
        %p283 = scmp.eq.s32.totalorder %s21, 3
        // Predicated region
        $region41: #{tpu_custom_call.1} parent=31 // pred_check
          %p284 = pneg %p283
        $region42: #{tpu_custom_call.1} parent=31 // pred_check_branch
          %286 = sbr.rel (%p284) target = $region44
        $region43: #{tpu_custom_call.1} parent=31 // pred_region
          %v287 = vld [vmem:[#allocation2] sm:$0xff]
          %v288 = vld [vmem:[#allocation2 + $0x8] sm:$0xff]
          %289 = vst [vmem:[#allocation6] sm:$0xff] %v287
          %290 = vst [vmem:[#allocation6 + $0x8] sm:$0xff] %v288
        $region44: #{tpu_custom_call.1} parent=31 // pred_fallthru
          _
        // Predicated region
        $region45: #{tpu_custom_call.1} parent=31 // pred_check
          %p291 = pneg %p119
        $region46: #{tpu_custom_call.1} parent=31 // pred_check_branch
          %293 = sbr.rel (%p291) target = $region48
        $region47: #{tpu_custom_call.1} parent=31 // pred_region
          %s294 = smul.u32 2, %s20
          %296 = vsyncadd [#allocation5], 0
          %s297 = smul.addr %s294, 8
          %s298 = scalar_lea.hbm %s3, %s297
          %s299 = sshll.u32 [#allocation6], 4
          %s300 = int_to_ptr.vmem [resolvable:$true] %s299
          %s301 = sshll.u32 %s298, 4
          %s302 = int_to_ptr.hbm [resolvable:$true] %s301
          %307 = dma.vmem_to_hbm [thread:$0]  %s300, 256, %s302, [#allocation5], 128, 128, 8
        $region48: #{tpu_custom_call.1} parent=31 // pred_fallthru
          _
        // Predicated region
        $region49: #{tpu_custom_call.1} parent=31 // pred_check
          %p308 = pneg %p119
        $region50: #{tpu_custom_call.1} parent=31 // pred_check_branch
          %310 = sbr.rel (%p308) target = $region52
        $region51: #{tpu_custom_call.1} parent=31 // pred_region
          %312 = dma.done [#allocation5], 256
        $region52: #{tpu_custom_call.1} parent=31 // pred_fallthru
          _
      $region32: #{tpu_custom_call.1} parent=5 // pred_fallthru
        _
      %p313 = scmp.le.s32.totalorder 2, %s11
      // Predicated region
      $region53: #{tpu_custom_call.1} parent=5 // pred_check
        %p314 = pneg %p313
      $region54: #{tpu_custom_call.1} parent=5 // pred_check_branch
        %316 = sbr.rel (%p314) target = $region56
      $region55: #{tpu_custom_call.1} parent=5 // pred_region
        %s317 = ssub.s32 %s11, 2
      $region56: #{tpu_custom_call.1} parent=5 // pred_fallthru
        _
    $region6: #{tpu_custom_call.1} parent=1 // loop_footer
      %s15 = sadd.s32 1, %s11
    $region7: #{tpu_custom_call.1} parent=1 // loop_footer_branch
      %10 = sbr.rel target = $region3
    $region8: #{tpu_custom_call.1} parent=1 // loop_exit
      _
    %318 = vsyncpa [#allocation4], 1
    %s319 = scalar_lea.sflag [#allocation4], 1
    %320 = vsyncpa %s319, 1
    %321 = vsyncpa [#allocation5], 1
    %s322 = scalar_lea.sflag [#allocation5], 1
    %323 = vsyncpa %s322, 1

</llo_original>
